<compile_context>
chip_gen: v7x
topology: tpu7x:2x2x1
jax: 0.10.0
libtpu: 0.0.40
codegen_flags: <defaults>
</compile_context>

<pallas_src>
import functools

import jax
import jax.numpy as jnp
from jax.experimental import pallas as pl
from jax.experimental.pallas import tpu as pltpu

_VMEM_BUDGET = 48 * 1024 * 1024  # conservative: fits v7x's 64 MiB physical VMEM


def _round_up(n, m):
    return ((n + m - 1) // m) * m


def _vmem_footprint(tm, d, x_itemsize, w_itemsize):
    # x, emb, out row tiles are double-buffered by the pipeline; the grid-invariant
    # weight / bias / gamma / beta blocks are also double-buffered by BlockSpec.
    tiles = 2 * 3 * tm * d * x_itemsize
    weights = 2 * (2 * d * d * w_itemsize + 4 * d * 4)
    return tiles + weights


def _adaln_kernel(x_ref, emb_ref, ww_ref, wb_ref, pbw_ref, pbb_ref,
                  gamma_ref, beta_ref, o_ref, *, eps):
    # Row tile in f32 for the LayerNorm math (matches torch's f32 path).
    x = x_ref[...].astype(jnp.float32)            # (tm, D)

    # Projection: two (tm, D) @ (D, D) MXU dots; resident weights stay in stored dtype.
    ww = ww_ref[...]                              # (D, D)  -> adaptive scale weight
    wb = wb_ref[...]                              # (D, D)  -> adaptive shift weight
    emb = emb_ref[...]                            # (tm, D)
    if emb.dtype != ww.dtype:
        emb = emb.astype(ww.dtype)                # cheap per-tile cast, not the weight
    ada_w = jnp.dot(emb, ww, preferred_element_type=jnp.float32) + pbw_ref[...]
    ada_b = jnp.dot(emb, wb, preferred_element_type=jnp.float32) + pbb_ref[...]

    # LayerNorm(x) over the last dim (biased variance, eps inside rsqrt).
    mean = jnp.mean(x, axis=-1, keepdims=True)
    xc = x - mean
    var = jnp.mean(xc * xc, axis=-1, keepdims=True)
    normed = xc * jax.lax.rsqrt(var + eps)
    normed = normed * gamma_ref[...] + beta_ref[...]

    o_ref[...] = (ada_w * normed + ada_b).astype(o_ref.dtype)


def adaptive_layer_norm(x, embedding, proj_w, proj_b, gamma, beta,
                        *, eps=1e-5, tm=256):
    """x, embedding: (B, T, D).  proj_w: (2D, D) torch layout, proj_b: (2D,)."""
    B, T, D = x.shape
    assert embedding.shape == (B, T, D)
    S = B * T

    # ---- choose a row tile that fits the VMEM budget and the row count
    tm_eff = max(8, min(_round_up(tm, 8), _round_up(S, 8)))
    while tm_eff > 8 and _vmem_footprint(tm_eff, D, x.dtype.itemsize,
                                         proj_w.dtype.itemsize) > _VMEM_BUDGET:
        tm_eff = max(8, (tm_eff // 2) // 8 * 8)
    S_pad = _round_up(S, tm_eff)

    # ---- flatten rows, zero-pad the tail tile (padded rows are sliced off afterwards)
    x2 = x.reshape(S, D)
    e2 = embedding.reshape(S, D)
    if S_pad != S:
        pad = ((0, S_pad - S), (0, 0))
        x2 = jnp.pad(x2, pad)
        e2 = jnp.pad(e2, pad)

    # ---- pre-split the projection: emb @ W^T + b   with W = [W_w ; W_b]
    wt = proj_w.T                                       # (D, 2D)
    ww = wt[:, :D]                                      # (D, D)  adaptive-scale weight
    wb = wt[:, D:]                                      # (D, D)  adaptive-shift weight
    pbw = proj_b[:D].reshape(1, D).astype(jnp.float32)  # small f32 vectors (resident)
    pbb = proj_b[D:].reshape(1, D).astype(jnp.float32)
    g2 = gamma.reshape(1, D).astype(jnp.float32)
    b2 = beta.reshape(1, D).astype(jnp.float32)
    # TODO(synk): for very large d_model (>= ~2048-4096) tile the (D, D) weight blocks
    # over a second grid axis instead of keeping them whole in VMEM.

    footprint = _vmem_footprint(tm_eff, D, x.dtype.itemsize, proj_w.dtype.itemsize)
    vmem_limit = int(min(64 * 1024 * 1024,
                         max(16 * 1024 * 1024, int(1.25 * footprint))))

    kernel = functools.partial(_adaln_kernel, eps=eps)
    grid = (S_pad // tm_eff,)

    cost = pl.CostEstimate(
        flops=4 * S_pad * D * D + 10 * S_pad * D,
        transcendentals=S_pad,
        bytes_accessed=(3 * S_pad * D * x.dtype.itemsize
                        + 2 * D * D * proj_w.dtype.itemsize
                        + 4 * D * 4),
    )

    out = pl.pallas_call(
        kernel,
        out_shape=jax.ShapeDtypeStruct((S_pad, D), x.dtype),
        grid_spec=pltpu.PrefetchScalarGridSpec(
            num_scalar_prefetch=0,
            grid=grid,
            in_specs=[
                pl.BlockSpec((tm_eff, D), lambda i: (i, 0)),   # x rows
                pl.BlockSpec((tm_eff, D), lambda i: (i, 0)),   # embedding rows
                pl.BlockSpec((D, D), lambda i: (0, 0)),        # W_w^T (resident)
                pl.BlockSpec((D, D), lambda i: (0, 0)),        # W_b^T (resident)
                pl.BlockSpec((1, D), lambda i: (0, 0)),        # proj bias (scale half)
                pl.BlockSpec((1, D), lambda i: (0, 0)),        # proj bias (shift half)
                pl.BlockSpec((1, D), lambda i: (0, 0)),        # LN gamma
                pl.BlockSpec((1, D), lambda i: (0, 0)),        # LN beta
            ],
            out_specs=pl.BlockSpec((tm_eff, D), lambda i: (i, 0)),
        ),
        compiler_params=pltpu.CompilerParams(
            dimension_semantics=("parallel",),
            vmem_limit_bytes=vmem_limit,
        ),
        cost_estimate=cost,
    )(x2, e2, ww, wb, pbw, pbb, g2, b2)

    return out[:S].reshape(B, T, D)


def _reference(x, embedding, proj_w, proj_b, gamma, beta, eps=1e-5):
    proj = jnp.einsum("btd,ed->bte", embedding, proj_w) + proj_b
    d = x.shape[-1]
    w, b = proj[..., :d], proj[..., d:]
    mean = jnp.mean(x, axis=-1, keepdims=True)
    var = jnp.mean((x - mean) ** 2, axis=-1, keepdims=True)
    normed = (x - mean) * jax.lax.rsqrt(var + eps) * gamma + beta
    return w * normed + b


if __name__ == "__main__":
    B, T, D = 2, 8, 32
    key = jax.random.PRNGKey(0)
    kx, ke, kw, kb = jax.random.split(key, 4)

    x = jax.random.normal(kx, (B, T, D), dtype=jnp.float32)
    embedding = jax.random.normal(ke, (B, T, D), dtype=jnp.float32)

    # Shapes from nn.Linear(D, 2D) + nn.LayerNorm(D).
    bound = 1.0 / (D ** 0.5)
    proj_w = jax.random.uniform(kw, (2 * D, D), minval=-bound, maxval=bound,
                                dtype=jnp.float32)
    proj_b = jax.random.uniform(kb, (2 * D,), minval=-bound, maxval=bound,
                                dtype=jnp.float32)
    gamma = jnp.ones((D,), dtype=jnp.float32)
    beta = jnp.zeros((D,), dtype=jnp.float32)

    out = adaptive_layer_norm(x, embedding, proj_w, proj_b, gamma, beta)
    out = jax.block_until_ready(out)

    ref = _reference(x, embedding, proj_w, proj_b, gamma, beta)
    assert out.shape == (B, T, D)
    assert jnp.allclose(out, ref, atol=1e-5, rtol=1e-5), "mismatch vs reference"

    print("KERNEL_OK")
</pallas_src>

<mosaic_0001>
module attributes {stable_mosaic.version = 11 : i64} {
  func.func @_adaln_kernel(%arg0: i32, %arg1: memref<16x32xf32, #tpu.memory_space<vmem>>, %arg2: memref<16x32xf32, #tpu.memory_space<vmem>>, %arg3: memref<32x32xf32, #tpu.memory_space<vmem>>, %arg4: memref<32x32xf32, #tpu.memory_space<vmem>>, %arg5: memref<1x32xf32, #tpu.memory_space<vmem>>, %arg6: memref<1x32xf32, #tpu.memory_space<vmem>>, %arg7: memref<1x32xf32, #tpu.memory_space<vmem>>, %arg8: memref<1x32xf32, #tpu.memory_space<vmem>>, %arg9: memref<16x32xf32, #tpu.memory_space<vmem>>) attributes {dimension_semantics = [#tpu.dimension_semantics<parallel>], iteration_bounds = array<i64: 1>, scalar_prefetch = 0 : i64, scratch_operands = 0 : i64, tpu.core_type = #tpu.core_type<tc>, window_params = [{transform_indices = @transform_0, window_bounds = array<i64: 16, 32>}, {transform_indices = @transform_1, window_bounds = array<i64: 16, 32>}, {pipeline_mode = #tpu.pipeline_mode<synchronous>, transform_indices = @transform_2, window_bounds = array<i64: 32, 32>}, {pipeline_mode = #tpu.pipeline_mode<synchronous>, transform_indices = @transform_3, window_bounds = array<i64: 32, 32>}, {pipeline_mode = #tpu.pipeline_mode<synchronous>, transform_indices = @transform_4, window_bounds = array<i64: 1, 32>}, {pipeline_mode = #tpu.pipeline_mode<synchronous>, transform_indices = @transform_5, window_bounds = array<i64: 1, 32>}, {pipeline_mode = #tpu.pipeline_mode<synchronous>, transform_indices = @transform_6, window_bounds = array<i64: 1, 32>}, {pipeline_mode = #tpu.pipeline_mode<synchronous>, transform_indices = @transform_7, window_bounds = array<i64: 1, 32>}, {transform_indices = @transform_8, window_bounds = array<i64: 16, 32>}]} {
    %c0 = arith.constant 0 : index
    %c0_0 = arith.constant 0 : index
    %0 = vector.load %arg1[%c0, %c0_0] : memref<16x32xf32, #tpu.memory_space<vmem>>, vector<16x32xf32>
    %c0_1 = arith.constant 0 : index
    %c0_2 = arith.constant 0 : index
    %1 = vector.load %arg3[%c0_1, %c0_2] : memref<32x32xf32, #tpu.memory_space<vmem>>, vector<32x32xf32>
    %c0_3 = arith.constant 0 : index
    %c0_4 = arith.constant 0 : index
    %2 = vector.load %arg4[%c0_3, %c0_4] : memref<32x32xf32, #tpu.memory_space<vmem>>, vector<32x32xf32>
    %c0_5 = arith.constant 0 : index
    %c0_6 = arith.constant 0 : index
    %3 = vector.load %arg2[%c0_5, %c0_6] : memref<16x32xf32, #tpu.memory_space<vmem>>, vector<16x32xf32>
    %cst = arith.constant dense<0.000000e+00> : vector<16x32xf32>
    %4 = tpu.matmul %3, %1, %cst {dimension_numbers = #tpu.dot_dimension_numbers<[1], [0], [0], [1], [0, 0, 1, 1], [], []>} : vector<16x32xf32>, vector<32x32xf32>, vector<16x32xf32> -> vector<16x32xf32>
    %c0_7 = arith.constant 0 : index
    %c0_8 = arith.constant 0 : index
    %5 = vector.load %arg5[%c0_7, %c0_8] : memref<1x32xf32, #tpu.memory_space<vmem>>, vector<1x32xf32>
    %6 = vector.broadcast %5 : vector<1x32xf32> to vector<16x32xf32>
    %7 = arith.addf %4, %6 : vector<16x32xf32>
    %cst_9 = arith.constant dense<0.000000e+00> : vector<16x32xf32>
    %8 = tpu.matmul %3, %2, %cst_9 {dimension_numbers = #tpu.dot_dimension_numbers<[1], [0], [0], [1], [0, 0, 1, 1], [], []>} : vector<16x32xf32>, vector<32x32xf32>, vector<16x32xf32> -> vector<16x32xf32>
    %c0_10 = arith.constant 0 : index
    %c0_11 = arith.constant 0 : index
    %9 = vector.load %arg6[%c0_10, %c0_11] : memref<1x32xf32, #tpu.memory_space<vmem>>, vector<1x32xf32>
    %10 = vector.broadcast %9 : vector<1x32xf32> to vector<16x32xf32>
    %11 = arith.addf %8, %10 : vector<16x32xf32>
    %cst_12 = arith.constant dense<0.000000e+00> : vector<16xf32>
    %12 = vector.multi_reduction <add>, %0, %cst_12 [1] : vector<16x32xf32> to vector<16xf32>
    %13 = vector.shape_cast %12 : vector<16xf32> to vector<16x1xf32>
    %cst_13 = arith.constant 3.200000e+01 : f32
    %14 = vector.broadcast %cst_13 : f32 to vector<16x1xf32>
    %15 = arith.divf %13, %14 : vector<16x1xf32>
    %16 = vector.broadcast %15 : vector<16x1xf32> to vector<16x32xf32>
    %17 = arith.subf %0, %16 : vector<16x32xf32>
    %18 = arith.mulf %17, %17 : vector<16x32xf32>
    %cst_14 = arith.constant dense<0.000000e+00> : vector<16xf32>
    %19 = vector.multi_reduction <add>, %18, %cst_14 [1] : vector<16x32xf32> to vector<16xf32>
    %20 = vector.shape_cast %19 : vector<16xf32> to vector<16x1xf32>
    %cst_15 = arith.constant 3.200000e+01 : f32
    %21 = vector.broadcast %cst_15 : f32 to vector<16x1xf32>
    %22 = arith.divf %20, %21 : vector<16x1xf32>
    %cst_16 = arith.constant 9.99999974E-6 : f32
    %23 = vector.broadcast %cst_16 : f32 to vector<16x1xf32>
    %24 = arith.addf %22, %23 : vector<16x1xf32>
    %25 = math.rsqrt %24 : vector<16x1xf32>
    %26 = vector.broadcast %25 : vector<16x1xf32> to vector<16x32xf32>
    %27 = arith.mulf %17, %26 : vector<16x32xf32>
    %c0_17 = arith.constant 0 : index
    %c0_18 = arith.constant 0 : index
    %28 = vector.load %arg7[%c0_17, %c0_18] : memref<1x32xf32, #tpu.memory_space<vmem>>, vector<1x32xf32>
    %29 = vector.broadcast %28 : vector<1x32xf32> to vector<16x32xf32>
    %30 = arith.mulf %27, %29 : vector<16x32xf32>
    %c0_19 = arith.constant 0 : index
    %c0_20 = arith.constant 0 : index
    %31 = vector.load %arg8[%c0_19, %c0_20] : memref<1x32xf32, #tpu.memory_space<vmem>>, vector<1x32xf32>
    %32 = vector.broadcast %31 : vector<1x32xf32> to vector<16x32xf32>
    %33 = arith.addf %30, %32 : vector<16x32xf32>
    %34 = arith.mulf %7, %33 : vector<16x32xf32>
    %35 = arith.addf %34, %11 : vector<16x32xf32>
    %c0_21 = arith.constant 0 : index
    %c0_22 = arith.constant 0 : index
    %36 = vector.load %arg9[%c0_21, %c0_22] : memref<16x32xf32, #tpu.memory_space<vmem>>, vector<16x32xf32>
    tpu.vector_store %arg9[%c0_21, %c0_22], %35 {strides = array<i32>} : memref<16x32xf32, #tpu.memory_space<vmem>>, vector<16x32xf32>,
    return
  }
  func.func @transform_0(%arg0: i32) -> (i32, i32) {
    %c0_i32 = arith.constant 0 : i32
    %c0_i32_0 = arith.constant 0 : i32
    return %arg0, %c0_i32 : i32, i32
  }
  func.func @transform_1(%arg0: i32) -> (i32, i32) {
    %c0_i32 = arith.constant 0 : i32
    %c0_i32_0 = arith.constant 0 : i32
    return %arg0, %c0_i32 : i32, i32
  }
  func.func @transform_2(%arg0: i32) -> (i32, i32) {
    %c0_i32 = arith.constant 0 : i32
    %c0_i32_0 = arith.constant 0 : i32
    %c0_i32_1 = arith.constant 0 : i32
    return %c0_i32, %c0_i32_0 : i32, i32
  }
  func.func @transform_3(%arg0: i32) -> (i32, i32) {
    %c0_i32 = arith.constant 0 : i32
    %c0_i32_0 = arith.constant 0 : i32
    %c0_i32_1 = arith.constant 0 : i32
    return %c0_i32, %c0_i32_0 : i32, i32
  }
  func.func @transform_4(%arg0: i32) -> (i32, i32) {
    %c0_i32 = arith.constant 0 : i32
    %c0_i32_0 = arith.constant 0 : i32
    %c0_i32_1 = arith.constant 0 : i32
    return %c0_i32, %c0_i32_0 : i32, i32
  }
  func.func @transform_5(%arg0: i32) -> (i32, i32) {
    %c0_i32 = arith.constant 0 : i32
    %c0_i32_0 = arith.constant 0 : i32
    %c0_i32_1 = arith.constant 0 : i32
    return %c0_i32, %c0_i32_0 : i32, i32
  }
  func.func @transform_6(%arg0: i32) -> (i32, i32) {
    %c0_i32 = arith.constant 0 : i32
    %c0_i32_0 = arith.constant 0 : i32
    %c0_i32_1 = arith.constant 0 : i32
    return %c0_i32, %c0_i32_0 : i32, i32
  }
  func.func @transform_7(%arg0: i32) -> (i32, i32) {
    %c0_i32 = arith.constant 0 : i32
    %c0_i32_0 = arith.constant 0 : i32
    %c0_i32_1 = arith.constant 0 : i32
    return %c0_i32, %c0_i32_0 : i32, i32
  }
  func.func @transform_8(%arg0: i32) -> (i32, i32) {
    %c0_i32 = arith.constant 0 : i32
    %c0_i32_0 = arith.constant 0 : i32
    return %arg0, %c0_i32 : i32, i32
  }
}

</mosaic_0001>

<llo_original>
// kernel: tpu_custom_call.1
$region0: #{tpu_custom_call.1}
  #allocation0 [shape = 'u32[]', space=smem, size = 0x4, offset = 0x4, fixed_abs, tag = 'smem constant byte address 0x4 - core index']
  #allocation1 [shape = 'u32[144,128]{1,0:T(1,128)}', space=vmem, size = 0x12000, scoped, tag = 'internal scratch']
  %s0 = inlined_call_operand.hbm [shape: f32[16,32], index: 0, kind: input, shape index: {}]
  %s1 = inlined_call_operand.hbm [shape: f32[16,32], index: 1, kind: input, shape index: {}]
  %s2 = inlined_call_operand.hbm [shape: f32[32,32], index: 2, kind: input, shape index: {}]
  %s3 = inlined_call_operand.hbm [shape: f32[32,32], index: 3, kind: input, shape index: {}]
  %s4 = inlined_call_operand.vmem [shape: f32[1,32], index: 4, kind: input, shape index: {}]
  %s5 = inlined_call_operand.vmem [shape: f32[1,32], index: 5, kind: input, shape index: {}]
  %s6 = inlined_call_operand.vmem [shape: f32[1,32], index: 6, kind: input, shape index: {}]
  %s7 = inlined_call_operand.vmem [shape: f32[1,32], index: 7, kind: input, shape index: {}]
  %s8 = inlined_call_operand.hbm [shape: f32[16,32], index: 8, kind: output, shape index: {}]
  %s9 = sld [smem:[#allocation0]]
  $region58: #{tpu_custom_call.1} parent=0
    _
  %s11 = ssub.s32 1, %s9
  %s12 = scalar_select 0, %s11, %s9
  $region1: #{tpu_custom_call.1} parent=0
    #allocation2 [shape = 'u8[8192]{0}', space=vmem, size = 0x2000, scoped, tag = 'input window, operand 0, single buffered']
    #allocation3 [shape = 's32[1]{0}', space=sflag, size = 0x4, scoped, tag = 'scoped memory for tpu_custom_call.1']
    #allocation4 [shape = 's32[1]{0}', space=sflag, size = 0x4, scoped, tag = 'scoped memory for tpu_custom_call.1']
    #allocation5 [shape = 'u8[8192]{0}', space=vmem, size = 0x2000, scoped, tag = 'input window, operand 1, single buffered']
    #allocation6 [shape = 's32[1]{0}', space=sflag, size = 0x4, scoped, tag = 'scoped memory for tpu_custom_call.1']
    #allocation7 [shape = 'u8[16384]{0}', space=vmem, size = 0x4000, scoped, tag = 'input window, operand 2, single buffered']
    #allocation8 [shape = 'u8[16384]{0}', space=vmem, size = 0x4000, scoped, tag = 'input window, operand 3, single buffered']
    #allocation9 [shape = 's32[1]{0}', space=sflag, size = 0x4, scoped, tag = 'scoped memory for tpu_custom_call.1']
    #allocation10 [shape = 'u8[8192]{0}', space=vmem, size = 0x2000, scoped, tag = 'output window, operand 0, single buffered']
    %13 = vsyncpa [#allocation3], 0
    %14 = vsyncpa [#allocation6], 0
    %15 = vsyncpa [#allocation9], 0
    %16 = vsyncpa [#allocation4], 0
    // Predicated region
    $region2: #{tpu_custom_call.1} parent=1 // pred_check
      _
    $region3: #{tpu_custom_call.1} parent=1 // pred_check_branch
      %18 = sbr.rel (0) target = $region5
    $region4: #{tpu_custom_call.1} parent=1 // pred_region
      %s20 = ssub.s32 256, 256
      %21 = vsyncadd [#allocation3], %s20
      %s22 = sshll.u32 [#allocation2], 4
      %s23 = int_to_ptr.vmem [resolvable:$true] %s22
      %28 = dma.hbm_to_vmem [thread:$0]  %s0, 256, %s23, [#allocation3], 128, 128, 8
    $region5: #{tpu_custom_call.1} parent=1 // pred_fallthru
      _
    // Predicated region
    $region6: #{tpu_custom_call.1} parent=1 // pred_check
      _
    $region7: #{tpu_custom_call.1} parent=1 // pred_check_branch
      %30 = sbr.rel (0) target = $region9
    $region8: #{tpu_custom_call.1} parent=1 // pred_region
      %s32 = ssub.s32 256, 256
      %33 = vsyncadd [#allocation6], %s32
      %s34 = sshll.u32 [#allocation5], 4
      %s35 = int_to_ptr.vmem [resolvable:$true] %s34
      %40 = dma.hbm_to_vmem [thread:$0]  %s1, 256, %s35, [#allocation6], 128, 128, 8
    $region9: #{tpu_custom_call.1} parent=1 // pred_fallthru
      _
    // Predicated region
    $region10: #{tpu_custom_call.1} parent=1 // pred_check
      _
    $region11: #{tpu_custom_call.1} parent=1 // pred_check_branch
      %42 = sbr.rel (0) target = $region13
    $region12: #{tpu_custom_call.1} parent=1 // pred_region
      %s44 = ssub.s32 512, 512
      %45 = vsyncadd [#allocation6], %s44
      %s46 = sshll.u32 [#allocation7], 4
      %s47 = int_to_ptr.vmem [resolvable:$true] %s46
      %52 = dma.hbm_to_vmem [thread:$0]  %s2, 512, %s47, [#allocation6], 128, 128, 8
    $region13: #{tpu_custom_call.1} parent=1 // pred_fallthru
      _
    // Predicated region
    $region14: #{tpu_custom_call.1} parent=1 // pred_check
      _
    $region15: #{tpu_custom_call.1} parent=1 // pred_check_branch
      %54 = sbr.rel (0) target = $region17
    $region16: #{tpu_custom_call.1} parent=1 // pred_region
      %s56 = ssub.s32 512, 512
      %57 = vsyncadd [#allocation9], %s56
      %s58 = sshll.u32 [#allocation8], 4
      %s59 = int_to_ptr.vmem [resolvable:$true] %s58
      %64 = dma.hbm_to_vmem [thread:$0]  %s3, 512, %s59, [#allocation9], 128, 128, 8
    $region17: #{tpu_custom_call.1} parent=1 // pred_fallthru
      _
    // Predicated region
    $region18: #{tpu_custom_call.1} parent=1 // pred_check
      _
    $region19: #{tpu_custom_call.1} parent=1 // pred_check_branch
      %66 = sbr.rel (0) target = $region21
    $region20: #{tpu_custom_call.1} parent=1 // pred_region
      _
    $region21: #{tpu_custom_call.1} parent=1 // pred_fallthru
      _
    // Predicated region
    $region22: #{tpu_custom_call.1} parent=1 // pred_check
      _
    $region23: #{tpu_custom_call.1} parent=1 // pred_check_branch
      %68 = sbr.rel (0) target = $region25
    $region24: #{tpu_custom_call.1} parent=1 // pred_region
      _
    $region25: #{tpu_custom_call.1} parent=1 // pred_fallthru
      _
    // Predicated region
    $region26: #{tpu_custom_call.1} parent=1 // pred_check
      _
    $region27: #{tpu_custom_call.1} parent=1 // pred_check_branch
      %70 = sbr.rel (0) target = $region29
    $region28: #{tpu_custom_call.1} parent=1 // pred_region
      _
    $region29: #{tpu_custom_call.1} parent=1 // pred_fallthru
      _
    // Predicated region
    $region30: #{tpu_custom_call.1} parent=1 // pred_check
      _
    $region31: #{tpu_custom_call.1} parent=1 // pred_check_branch
      %72 = sbr.rel (0) target = $region33
    $region32: #{tpu_custom_call.1} parent=1 // pred_region
      _
    $region33: #{tpu_custom_call.1} parent=1 // pred_fallthru
      _
    // Predicated region
    $region34: #{tpu_custom_call.1} parent=1 // pred_check
      _
    $region35: #{tpu_custom_call.1} parent=1 // pred_check_branch
      %74 = sbr.rel (0) target = $region37
    $region36: #{tpu_custom_call.1} parent=1 // pred_region
      %75 = dma.done [#allocation3], 256
    $region37: #{tpu_custom_call.1} parent=1 // pred_fallthru
      _
    // Predicated region
    $region38: #{tpu_custom_call.1} parent=1 // pred_check
      _
    $region39: #{tpu_custom_call.1} parent=1 // pred_check_branch
      %77 = sbr.rel (0) target = $region41
    $region40: #{tpu_custom_call.1} parent=1 // pred_region
      %78 = dma.done [#allocation6], 256
    $region41: #{tpu_custom_call.1} parent=1 // pred_fallthru
      _
    // Predicated region
    $region42: #{tpu_custom_call.1} parent=1 // pred_check
      _
    $region43: #{tpu_custom_call.1} parent=1 // pred_check_branch
      %80 = sbr.rel (0) target = $region45
    $region44: #{tpu_custom_call.1} parent=1 // pred_region
      %81 = dma.done [#allocation6], 512
    $region45: #{tpu_custom_call.1} parent=1 // pred_fallthru
      _
    // Predicated region
    $region46: #{tpu_custom_call.1} parent=1 // pred_check
      _
    $region47: #{tpu_custom_call.1} parent=1 // pred_check_branch
      %83 = sbr.rel (0) target = $region49
    $region48: #{tpu_custom_call.1} parent=1 // pred_region
      %84 = dma.done [#allocation9], 512
    $region49: #{tpu_custom_call.1} parent=1 // pred_fallthru
      _
    %v85 = vld [vmem:[#allocation2] sm:$0xff]
    %v86 = vld [vmem:[#allocation2 + $0x8] sm:$0xff]
    %v87 = vld [vmem:[#allocation7] sm:$0xff]
    %v88 = vld [vmem:[#allocation7 + $0x8] sm:$0xff]
    %v89 = vld [vmem:[#allocation7 + $0x10] sm:$0xff]
    %v90 = vld [vmem:[#allocation7 + $0x18] sm:$0xff]
    %v91 = vld [vmem:[#allocation8] sm:$0xff]
    %v92 = vld [vmem:[#allocation8 + $0x8] sm:$0xff]
    %v93 = vld [vmem:[#allocation8 + $0x10] sm:$0xff]
    %v94 = vld [vmem:[#allocation8 + $0x18] sm:$0xff]
    %v95 = vld [vmem:[#allocation5] sm:$0xff]
    %v96 = vld [vmem:[#allocation5 + $0x8] sm:$0xff]
    %v97 = vld [vmem:[%s4] sm:$0x1]
    %v99 = vlaneseq
    %v100 = vshrl.u32 %v99, 7
    %v101 = vsub.s32 0, %v100
    %v102 = vrot.slane %v97, %v101
    %vm104 = vcmask 261120
    %v106 = vsel %vm104, %v95, 0
    %v109 = vsel %vm104, %v96, 0
    %111 = vmatprep.subr.mxu0 0.0
    %112 = vmatpush1.msra.mxu0 %v87
    %113 = vmatprep.subr.mxu0 0.0
    %114 = vmatpush1.msra.mxu0 %v88
    %115 = vmatprep.subr.mxu0 0.0
    %116 = vmatpush1.msra.mxu0 %v89
    %117 = vmatprep.subr.mxu0 0.0
    %118 = vmatpush1.msra.mxu0 %v90
    %119 = vmatprep.subr.mxu0 0.0
    %120 = vmatpush1.msra.mxu0 0.0
    %121 = vmatprep.subr.mxu0 0.0
    %122 = vmatpush1.msra.mxu0 0.0
    %123 = vmatprep.subr.mxu0 0.0
    %124 = vmatpush1.msra.mxu0 0.0
    %125 = vmatprep.subr.mxu0 0.0
    %126 = vmatpush1.msra.mxu0 0.0
    %127 = vmatprep.subr.mxu0 0.0
    %128 = vmatpush1.msra.mxu0 0.0
    %129 = vmatprep.subr.mxu0 0.0
    %130 = vmatpush1.msra.mxu0 0.0
    %131 = vmatprep.subr.mxu0 0.0
    %132 = vmatpush1.msra.mxu0 0.0
    %133 = vmatprep.subr.mxu0 0.0
    %134 = vmatpush1.msra.mxu0 0.0
    %135 = vmatprep.subr.mxu0 0.0
    %136 = vmatpush1.msra.mxu0 0.0
    %137 = vmatprep.subr.mxu0 0.0
    %138 = vmatpush1.msra.mxu0 0.0
    %139 = vmatprep.subr.mxu0 0.0
    %140 = vmatpush1.msra.mxu0 0.0
    %141 = vmatprep.subr.mxu0 0.0
    %142 = vmatpush1.msra.mxu0 0.0
    %143 = vmatprep.subr.mxu0 0.0
    %144 = vmatpush1.msra.mxu0 0.0
    %145 = vmatprep.subr.mxu0 0.0
    %146 = vmatpush1.msra.mxu0 0.0
    %147 = vmatprep.subr.mxu0 0.0
    %148 = vmatpush1.msra.mxu0 0.0
    %149 = vmatprep.subr.mxu0 0.0
    %150 = vmatpush1.msra.mxu0 0.0
    %151 = vmatprep.subr.mxu0 0.0
    %152 = vmatpush1.msra.mxu0 0.0
    %153 = vmatprep.subr.mxu0 0.0
    %154 = vmatpush1.msra.mxu0 0.0
    %155 = vmatprep.subr.mxu0 0.0
    %156 = vmatpush1.msra.mxu0 0.0
    %157 = vmatprep.subr.mxu0 0.0
    %158 = vmatpush1.msra.mxu0 0.0
    %159 = vmatprep.subr.mxu0 0.0
    %160 = vmatpush1.msra.mxu0 0.0
    %161 = vmatprep.subr.mxu0 0.0
    %162 = vmatpush1.msra.mxu0 0.0
    %163 = vmatprep.subr.mxu0 0.0
    %164 = vmatpush1.msra.mxu0 0.0
    %165 = vmatprep.subr.mxu0 0.0
    %166 = vmatpush1.msra.mxu0 0.0
    %167 = vmatprep.subr.mxu0 0.0
    %168 = vmatpush1.msra.mxu0 0.0
    %169 = vmatprep.subr.mxu0 0.0
    %170 = vmatpush1.msra.mxu0 0.0
    %171 = vmatprep.subr.mxu0 0.0
    %172 = vmatpush1.msra.mxu0 0.0
    %173 = vmatprep.subr.mxu0 0.0
    %174 = vmatpush1.msra.mxu0 0.0
    %175 = vmatprep.mubr.f32.mxu0 0.0
    %176 = vmatmul.mubr.f32.gmra.mrb[0].mxu0 %v106
    %v177 = vpop.f32.mrb[0].mxu0
    %v178 = vadd.f32 %v102, %v177
    %v179 = vpop.f32.mrb[0].mxu0
    %180 = vmatprep.mubr.f32.mxu0 0.0
    %181 = vmatmul.mubr.f32.gmra.mrb[0].mxu0 %v109
    %v182 = vpop.f32.mrb[0].mxu0
    %v183 = vadd.f32 %v102, %v182
    %v184 = vpop.f32.mrb[0].mxu0
    %185 = vdwg.mxu0
    %v186 = vld [vmem:[%s5] sm:$0x1]
    %v188 = vlaneseq
    %v189 = vshrl.u32 %v188, 7
    %v190 = vsub.s32 0, %v189
    %v191 = vrot.slane %v186, %v190
    %193 = vmatprep.subr.mxu0 0.0
    %194 = vmatpush1.msra.mxu0 %v91
    %195 = vmatprep.subr.mxu0 0.0
    %196 = vmatpush1.msra.mxu0 %v92
    %197 = vmatprep.subr.mxu0 0.0
    %198 = vmatpush1.msra.mxu0 %v93
    %199 = vmatprep.subr.mxu0 0.0
    %200 = vmatpush1.msra.mxu0 %v94
    %201 = vmatprep.subr.mxu0 0.0
    %202 = vmatpush1.msra.mxu0 0.0
    %203 = vmatprep.subr.mxu0 0.0
    %204 = vmatpush1.msra.mxu0 0.0
    %205 = vmatprep.subr.mxu0 0.0
    %206 = vmatpush1.msra.mxu0 0.0
    %207 = vmatprep.subr.mxu0 0.0
    %208 = vmatpush1.msra.mxu0 0.0
    %209 = vmatprep.subr.mxu0 0.0
    %210 = vmatpush1.msra.mxu0 0.0
    %211 = vmatprep.subr.mxu0 0.0
    %212 = vmatpush1.msra.mxu0 0.0
    %213 = vmatprep.subr.mxu0 0.0
    %214 = vmatpush1.msra.mxu0 0.0
    %215 = vmatprep.subr.mxu0 0.0
    %216 = vmatpush1.msra.mxu0 0.0
    %217 = vmatprep.subr.mxu0 0.0
    %218 = vmatpush1.msra.mxu0 0.0
    %219 = vmatprep.subr.mxu0 0.0
    %220 = vmatpush1.msra.mxu0 0.0
    %221 = vmatprep.subr.mxu0 0.0
    %222 = vmatpush1.msra.mxu0 0.0
    %223 = vmatprep.subr.mxu0 0.0
    %224 = vmatpush1.msra.mxu0 0.0
    %225 = vmatprep.subr.mxu0 0.0
    %226 = vmatpush1.msra.mxu0 0.0
    %227 = vmatprep.subr.mxu0 0.0
    %228 = vmatpush1.msra.mxu0 0.0
    %229 = vmatprep.subr.mxu0 0.0
    %230 = vmatpush1.msra.mxu0 0.0
    %231 = vmatprep.subr.mxu0 0.0
    %232 = vmatpush1.msra.mxu0 0.0
    %233 = vmatprep.subr.mxu0 0.0
    %234 = vmatpush1.msra.mxu0 0.0
    %235 = vmatprep.subr.mxu0 0.0
    %236 = vmatpush1.msra.mxu0 0.0
    %237 = vmatprep.subr.mxu0 0.0
    %238 = vmatpush1.msra.mxu0 0.0
    %239 = vmatprep.subr.mxu0 0.0
    %240 = vmatpush1.msra.mxu0 0.0
    %241 = vmatprep.subr.mxu0 0.0
    %242 = vmatpush1.msra.mxu0 0.0
    %243 = vmatprep.subr.mxu0 0.0
    %244 = vmatpush1.msra.mxu0 0.0
    %245 = vmatprep.subr.mxu0 0.0
    %246 = vmatpush1.msra.mxu0 0.0
    %247 = vmatprep.subr.mxu0 0.0
    %248 = vmatpush1.msra.mxu0 0.0
    %249 = vmatprep.subr.mxu0 0.0
    %250 = vmatpush1.msra.mxu0 0.0
    %251 = vmatprep.subr.mxu0 0.0
    %252 = vmatpush1.msra.mxu0 0.0
    %253 = vmatprep.subr.mxu0 0.0
    %254 = vmatpush1.msra.mxu0 0.0
    %255 = vmatprep.subr.mxu0 0.0
    %256 = vmatpush1.msra.mxu0 0.0
    %257 = vmatprep.mubr.f32.mxu0 0.0
    %258 = vmatmul.mubr.f32.gmra.mrb[0].mxu0 %v106
    %v259 = vpop.f32.mrb[0].mxu0
    %v260 = vadd.f32 %v191, %v259
    %v261 = vpop.f32.mrb[0].mxu0
    %262 = vmatprep.mubr.f32.mxu0 0.0
    %263 = vmatmul.mubr.f32.gmra.mrb[0].mxu0 %v109
    %v264 = vpop.f32.mrb[0].mxu0
    %v265 = vadd.f32 %v191, %v264
    %v266 = vpop.f32.mrb[0].mxu0
    %267 = vdwg.mxu0
    %v268 = vsel %vm104, %v85, 0.0
    %269 = vadd.xlane.f32.xlu0 %v268
    %v270 = vpop.xlane.xlu0 %269
    %v271 = vsel %vm104, %v86, 0.0
    %272 = vadd.xlane.f32.xlu0 %v271
    %v273 = vpop.xlane.xlu0 %272
    %v274 = vrcp.pop 32.0
    %v275 = vmul.f32 %v270, %v274
    %v276 = vmul.f32 %v273, %v274
    %v277 = vsub.f32 %v85, %v275
    %v278 = vsub.f32 %v86, %v276
    %v279 = vmul.f32 %v277, %v277
    %v280 = vmul.f32 %v278, %v278
    %v281 = vsel %vm104, %v279, 0.0
    %282 = vadd.xlane.f32.xlu0 %v281
    %v283 = vpop.xlane.xlu0 %282
    %v284 = vsel %vm104, %v280, 0.0
    %285 = vadd.xlane.f32.xlu0 %v284
    %v286 = vpop.xlane.xlu0 %285
    %v287 = vmul.f32 %v283, %v274
    %v288 = vmul.f32 %v286, %v274
    %v289 = vadd.f32 %v287, 1e-05
    %v290 = vadd.f32 %v288, 1e-05
    %v291 = vrsqrt.pop %v289
    %v292 = vrsqrt.pop %v290
    %v293 = vmul.f32 %v277, %v291
    %v294 = vmul.f32 %v278, %v292
    %v295 = vld [vmem:[%s6] sm:$0x1]
    %v297 = vlaneseq
    %v298 = vshrl.u32 %v297, 7
    %v299 = vsub.s32 0, %v298
    %v300 = vrot.slane %v295, %v299
    %v302 = vmul.f32 %v293, %v300
    %v303 = vmul.f32 %v294, %v300
    %v304 = vld [vmem:[%s7] sm:$0x1]
    %v306 = vlaneseq
    %v307 = vshrl.u32 %v306, 7
    %v308 = vsub.s32 0, %v307
    %v309 = vrot.slane %v304, %v308
    %v311 = vadd.f32 %v302, %v309
    %v312 = vadd.f32 %v303, %v309
    %v313 = vmul.f32 %v178, %v311
    %v314 = vmul.f32 %v183, %v312
    %v315 = vadd.f32 %v313, %v260
    %v316 = vadd.f32 %v314, %v265
    %317 = vst.msk [vmem:[#allocation10] sm:$0xff] %vm104, %v315
    %318 = vst.msk [vmem:[#allocation10 + $0x8] sm:$0xff] %vm104, %v316
    // Predicated region
    $region50: #{tpu_custom_call.1} parent=1 // pred_check
      _
    $region51: #{tpu_custom_call.1} parent=1 // pred_check_branch
      %320 = sbr.rel (0) target = $region53
    $region52: #{tpu_custom_call.1} parent=1 // pred_region
      %s322 = ssub.s32 256, 256
      %323 = vsyncadd [#allocation4], %s322
      %s324 = sshll.u32 [#allocation10], 4
      %s325 = int_to_ptr.vmem [resolvable:$true] %s324
      %330 = dma.vmem_to_hbm [thread:$0]  %s325, 256, %s8, [#allocation4], 128, 128, 8
    $region53: #{tpu_custom_call.1} parent=1 // pred_fallthru
      _
    // Predicated region
    $region54: #{tpu_custom_call.1} parent=1 // pred_check
      _
    $region55: #{tpu_custom_call.1} parent=1 // pred_check_branch
      %332 = sbr.rel (0) target = $region57
    $region56: #{tpu_custom_call.1} parent=1 // pred_region
      %333 = dma.done [#allocation4], 256
    $region57: #{tpu_custom_call.1} parent=1 // pred_fallthru
      _
    %334 = vsyncpa [#allocation3], 1
    %335 = vsyncpa [#allocation6], 1
    %336 = vsyncpa [#allocation9], 1
    %337 = vsyncpa [#allocation4], 1

</llo_original>
